<compile_context>
chip_gen: v7x
topology: tpu7x:2x2x1
jax: 0.10.0
libtpu: 0.0.40
codegen_flags: <defaults>
</compile_context>

<pallas_src>
import functools

import jax
import jax.numpy as jnp
from jax import lax
from jax.experimental import pallas as pl
from jax.experimental.pallas import tpu as pltpu

LANES = 128
SUBLANES = 8


def _round_up(x, m):
    return ((x + m - 1) // m) * m


def _default_num_partials():
    """2 partial sums on dual-TensorCore chips (v7x, v4 megacore), else 1."""
    try:
        kind = jax.devices()[0].device_kind.lower()
    except Exception:
        return 1
    return 2 if ("v7" in kind or "v4" in kind) else 1


def _sse_kernel(a_ref, b_ref, o_ref, *, tile_rows, inner_steps, rows,
                num_blocks, fan, needs_mask):
    """Accumulate partial sums of (a - b)^2 into a resident (1, 8, 128) block.

    Grid = (num_partials, inner_steps). The inner (reduction) axis maps to the
    same output block, so o_ref stays in VMEM and acts as the accumulator.
    """
    p = pl.program_id(0)
    i = pl.program_id(1)

    @pl.when(i == 0)
    def _init():
        o_ref[...] = jnp.zeros_like(o_ref)

    d = a_ref[...].astype(jnp.float32) - b_ref[...].astype(jnp.float32)
    sq = d * d

    def fold(x):
        # (tile, 128) -> (8, 128) via `fan` independent partial chains followed
        # by a short combine, so VALU *latency* (not a tile/8-long dependent
        # chain) never eats the slack under the per-block DMA.
        x4 = x.reshape(fan, tile_rows // (SUBLANES * fan), SUBLANES, LANES)
        return x4.sum(axis=1).sum(axis=0)

    if not needs_mask:
        # Statically known: every block is full and real — no mask code at all.
        o_ref[...] += fold(sq)[None, :, :]
    else:
        g = p * inner_steps + i                       # logical block index
        is_real = g < num_blocks                      # overcoverage block?
        start = jnp.minimum(g, num_blocks - 1) * tile_rows
        full = jnp.logical_and(is_real, start + tile_rows <= rows)

        @pl.when(full)
        def _fast():                                  # hot path: no mask work
            o_ref[...] += fold(sq)[None, :, :]

        @pl.when(jnp.logical_not(full))
        def _ragged():                                # at most 1-2 blocks total
            row_ids = start + lax.broadcasted_iota(
                jnp.int32, (tile_rows, LANES), 0)
            keep = jnp.logical_and(is_real, row_ids < rows)
            o_ref[...] += fold(jnp.where(keep, sq, 0.0))[None, :, :]


@functools.partial(jax.jit, static_argnames=("tile_rows", "num_partials"))
def hdr_loss(out_img, ref_img, *, tile_rows=8192, num_partials=None):
    assert out_img.shape == ref_img.shape, "shape mismatch"
    n_elems = out_img.size
    if num_partials is None:
        num_partials = _default_num_partials()

    # Flatten: free (bitcast) for contiguous inputs; keep native dtype, the
    # kernel casts per-block to f32.
    a = out_img.reshape(-1)
    b = ref_img.reshape(-1)

    # Lane alignment. When n % 128 == 0 (typical for image tensors, and the
    # demo below) NOTHING is materialized. Otherwise only the <128-element tail
    # is padded; this still copies the array in HBM.
    # TODO(synk): a true zero-copy path for 128-unaligned sizes needs 1-D
    # BlockSpecs / manual DMA from the raw buffer; skipped to keep lowering safe.
    pad = (-n_elems) % LANES
    if pad:
        a = jnp.pad(a, (0, pad))
        b = jnp.pad(b, (0, pad))
    rows = (n_elems + pad) // LANES
    a2 = a.reshape(rows, LANES)
    b2 = b.reshape(rows, LANES)

    # Block size: as big as requested (default 8192 rows = 4 MiB/input for f32)
    # but never larger than the 8-rounded slab, and capped so the
    # double-buffered working set (2 inputs x 2 buffers) stays <= 32 MiB —
    # comfortably inside v7x's 64 MiB physical VMEM and an explicitly raised
    # scoped limit on v5e.
    itemsize = max(a2.dtype.itemsize, b2.dtype.itemsize)
    max_rows_vmem = (32 << 20) // (2 * 2 * LANES * itemsize)
    vmem_cap_rows = max(SUBLANES, (max_rows_vmem // SUBLANES) * SUBLANES)
    tile = min(_round_up(tile_rows, SUBLANES),
               _round_up(rows, SUBLANES),
               vmem_cap_rows)

    num_blocks = pl.cdiv(rows, tile)
    num_partials = max(1, min(num_partials, num_blocks))  # no wasted partitions
    inner = pl.cdiv(num_blocks, num_partials)
    # Mask only when the logical grid covers more rows than actually exist
    # (ragged last block and/or a single overcoverage block).
    needs_mask = (num_partials * inner * tile) != rows

    # Fan-out of the per-block fold (independent accumulation chains).
    groups = tile // SUBLANES
    fan = 1
    for cand in (8, 4, 2):
        if groups % cand == 0:
            fan = cand
            break

    def in_map(p, i):
        # Clamp so we never request a block starting past the array; a clamped
        # (duplicated) block is fully zeroed in-kernel and happens at most once.
        return (jnp.minimum(p * inner + i, num_blocks - 1), 0)

    kernel = functools.partial(
        _sse_kernel,
        tile_rows=tile,
        inner_steps=inner,
        rows=rows,
        num_blocks=num_blocks,
        fan=fan,
        needs_mask=needs_mask,
    )

    # Explicit VMEM budget: 2 buffers x 2 inputs x block + headroom.
    block_bytes = tile * LANES * (a2.dtype.itemsize + b2.dtype.itemsize)
    vmem_limit = int(min(2 * block_bytes + (16 << 20), 48 << 20))

    partials = pl.pallas_call(
        kernel,
        out_shape=jax.ShapeDtypeStruct((num_partials, SUBLANES, LANES),
                                       jnp.float32),
        grid_spec=pltpu.PrefetchScalarGridSpec(
            num_scalar_prefetch=0,
            grid=(num_partials, inner),
            in_specs=[
                pl.BlockSpec((tile, LANES), in_map),
                pl.BlockSpec((tile, LANES), in_map),
            ],
            out_specs=pl.BlockSpec((1, SUBLANES, LANES), lambda p, i: (p, 0, 0)),
        ),
        compiler_params=pltpu.CompilerParams(
            dimension_semantics=("parallel", "arbitrary"),
            vmem_limit_bytes=vmem_limit,
        ),
    )(a2, b2)

    sse = jnp.sum(partials)  # tiny (num_partials, 8, 128) reduce in the wrapper
    return (sse / jnp.float32(n_elems)).astype(out_img.dtype)


if __name__ == "__main__":
    key = jax.random.PRNGKey(0)
    k1, k2 = jax.random.split(key)
    # Small NCHW images consistent with the module's forward (two images, same shape).
    out_img = jax.random.normal(k1, (2, 4, 16, 16), dtype=jnp.float32)
    ref_img = jax.random.normal(k2, (2, 4, 16, 16), dtype=jnp.float32)

    loss = hdr_loss(out_img, ref_img)
    jax.block_until_ready(loss)

    # Reference check in plain JAX (same semantics as torch.mean((a-b)**2)).
    ref = jnp.mean((out_img - ref_img) ** 2)
    assert jnp.allclose(loss, ref, rtol=1e-5, atol=1e-6), (loss, ref)

    print("KERNEL_OK")
</pallas_src>

<mosaic_0001>
module attributes {stable_mosaic.version = 11 : i64} {
  func.func @_sse_kernel(%arg0: i32, %arg1: i32, %arg2: memref<16x128xf32, #tpu.memory_space<vmem>>, %arg3: memref<16x128xf32, #tpu.memory_space<vmem>>, %arg4: memref<1x8x128xf32, #tpu.memory_space<vmem>>) attributes {dimension_semantics = [#tpu.dimension_semantics<parallel>, #tpu.dimension_semantics<arbitrary>], iteration_bounds = array<i64: 1, 1>, scalar_prefetch = 0 : i64, scratch_operands = 0 : i64, tpu.core_type = #tpu.core_type<tc>, window_params = [{transform_indices = @transform_0, window_bounds = array<i64: 16, 128>}, {transform_indices = @transform_1, window_bounds = array<i64: 16, 128>}, {transform_indices = @transform_2, window_bounds = array<i64: 1, 8, 128>}]} {
    %c0_i32 = arith.constant 0 : i32
    %0 = arith.cmpi eq, %arg1, %c0_i32 : i32
    %1 = arith.extui %0 : i1 to i32
    %c0_i32_0 = arith.constant 0 : i32
    %2 = arith.cmpi ne, %1, %c0_i32_0 : i32
    scf.if %2 {
      %cst_11 = arith.constant 0.000000e+00 : f32
      %14 = vector.broadcast %cst_11 : f32 to vector<1x8x128xf32>
      %c0_12 = arith.constant 0 : index
      %c0_13 = arith.constant 0 : index
      %c0_14 = arith.constant 0 : index
      %15 = vector.load %arg4[%c0_12, %c0_13, %c0_14] : memref<1x8x128xf32, #tpu.memory_space<vmem>>, vector<1x8x128xf32>
      tpu.vector_store %arg4[%c0_12, %c0_13, %c0_14], %14 {strides = array<i32>} : memref<1x8x128xf32, #tpu.memory_space<vmem>>, vector<1x8x128xf32>,
    } else {
    }
    %c0 = arith.constant 0 : index
    %c0_1 = arith.constant 0 : index
    %3 = vector.load %arg2[%c0, %c0_1] : memref<16x128xf32, #tpu.memory_space<vmem>>, vector<16x128xf32>
    %c0_2 = arith.constant 0 : index
    %c0_3 = arith.constant 0 : index
    %4 = vector.load %arg3[%c0_2, %c0_3] : memref<16x128xf32, #tpu.memory_space<vmem>>, vector<16x128xf32>
    %5 = arith.subf %3, %4 : vector<16x128xf32>
    %6 = arith.mulf %5, %5 : vector<16x128xf32>
    %c0_4 = arith.constant 0 : index
    %c0_5 = arith.constant 0 : index
    %c0_6 = arith.constant 0 : index
    %7 = vector.load %arg4[%c0_4, %c0_5, %c0_6] : memref<1x8x128xf32, #tpu.memory_space<vmem>>, vector<1x8x128xf32>
    %8 = vector.shape_cast %6 : vector<16x128xf32> to vector<2x1x8x128xf32>
    %cst = arith.constant dense<0.000000e+00> : vector<2x8x128xf32>
    %9 = vector.multi_reduction <add>, %8, %cst [1] : vector<2x1x8x128xf32> to vector<2x8x128xf32>
    %cst_7 = arith.constant dense<0.000000e+00> : vector<8x128xf32>
    %10 = vector.multi_reduction <add>, %9, %cst_7 [0] : vector<2x8x128xf32> to vector<8x128xf32>
    %11 = vector.shape_cast %10 : vector<8x128xf32> to vector<1x8x128xf32>
    %12 = arith.addf %7, %11 : vector<1x8x128xf32>
    %c0_8 = arith.constant 0 : index
    %c0_9 = arith.constant 0 : index
    %c0_10 = arith.constant 0 : index
    %13 = vector.load %arg4[%c0_8, %c0_9, %c0_10] : memref<1x8x128xf32, #tpu.memory_space<vmem>>, vector<1x8x128xf32>
    tpu.vector_store %arg4[%c0_8, %c0_9, %c0_10], %12 {strides = array<i32>} : memref<1x8x128xf32, #tpu.memory_space<vmem>>, vector<1x8x128xf32>,
    return
  }
  func.func @transform_0(%arg0: i32, %arg1: i32) -> (i32, i32) {
    %c1_i32 = arith.constant 1 : i32
    %0 = arith.muli %arg0, %c1_i32 : i32
    %1 = arith.addi %0, %arg1 : i32
    %c0_i32 = arith.constant 0 : i32
    %2 = arith.minsi %1, %c0_i32 : i32
    %c0_i32_0 = arith.constant 0 : i32
    %c0_i32_1 = arith.constant 0 : i32
    return %2, %c0_i32_0 : i32, i32
  }
  func.func @transform_1(%arg0: i32, %arg1: i32) -> (i32, i32) {
    %c1_i32 = arith.constant 1 : i32
    %0 = arith.muli %arg0, %c1_i32 : i32
    %1 = arith.addi %0, %arg1 : i32
    %c0_i32 = arith.constant 0 : i32
    %2 = arith.minsi %1, %c0_i32 : i32
    %c0_i32_0 = arith.constant 0 : i32
    %c0_i32_1 = arith.constant 0 : i32
    return %2, %c0_i32_0 : i32, i32
  }
  func.func @transform_2(%arg0: i32, %arg1: i32) -> (i32, i32, i32) {
    %c0_i32 = arith.constant 0 : i32
    %c0_i32_0 = arith.constant 0 : i32
    %c0_i32_1 = arith.constant 0 : i32
    return %arg0, %c0_i32, %c0_i32_0 : i32, i32, i32
  }
}

</mosaic_0001>

<llo_original>
// kernel: hdr_loss.1
$region0: #{hdr_loss.1}
  #allocation0 [shape = 'u32[]', space=smem, size = 0x4, offset = 0x4, fixed_abs, tag = 'smem constant byte address 0x4 - core index']
  #allocation1 [shape = 'u32[144,128]{1,0:T(1,128)}', space=vmem, size = 0x12000, scoped, tag = 'internal scratch']
  %s0 = inlined_call_operand.vmem [shape: f32[16,128], index: 0, kind: input, shape index: {}]
  %s1 = inlined_call_operand.vmem [shape: f32[16,128], index: 1, kind: input, shape index: {}]
  %s2 = inlined_call_operand.vmem [shape: f32[1,8,128], index: 2, kind: output, shape index: {}]
  %s3 = sld [smem:[#allocation0]]
  $region22: #{hdr_loss.1} parent=0
    _
  %s5 = ssub.s32 1, %s3
  %s6 = scalar_select 0, %s5, %s3
  // Predicated region
  $region2: #{hdr_loss.1} parent=0 // pred_check
    _
  $region3: #{hdr_loss.1} parent=0 // pred_check_branch
    %8 = sbr.rel (0) target = $region5
  $region4: #{hdr_loss.1} parent=0 // pred_region
    %s9 = sadd.s32 0, 0
    %p10 = scmp.lt.s32.totalorder %s9, 0
    %s11 = scalar_select %p10, %s9, 0
    %s12 = smul.u32 2, %s11
    %p13 = scmp.lt.s32.totalorder %s12, 1
    %s14 = scalar_select %p13, %s12, 1
    %s15 = smul.addr %s14, 8
    %s16 = scalar_lea.vmem %s0, %s15
    %s17 = sadd.s32 0, 0
    %p18 = scmp.lt.s32.totalorder %s17, 0
    %s19 = scalar_select %p18, %s17, 0
    %s20 = smul.u32 2, %s19
  $region5: #{hdr_loss.1} parent=0 // pred_fallthru
    _
  // Predicated region
  $region6: #{hdr_loss.1} parent=0 // pred_check
    _
  $region7: #{hdr_loss.1} parent=0 // pred_check_branch
    %22 = sbr.rel (0) target = $region9
  $region8: #{hdr_loss.1} parent=0 // pred_region
    %s23 = sadd.s32 0, 0
    %p24 = scmp.lt.s32.totalorder %s23, 0
    %s25 = scalar_select %p24, %s23, 0
    %s26 = smul.u32 2, %s25
    %p27 = scmp.lt.s32.totalorder %s26, 1
    %s28 = scalar_select %p27, %s26, 1
    %s29 = smul.addr %s28, 8
    %s30 = scalar_lea.vmem %s1, %s29
    %s31 = sadd.s32 0, 0
    %p32 = scmp.lt.s32.totalorder %s31, 0
    %s33 = scalar_select %p32, %s31, 0
    %s34 = smul.u32 2, %s33
  $region9: #{hdr_loss.1} parent=0 // pred_fallthru
    _
  %s35 = sadd.s32 0, 0
  %p36 = scmp.lt.s32.totalorder %s35, 0
  %s37 = scalar_select %p36, %s35, 0
  %s38 = smul.u32 2, %s37
  %p39 = scmp.lt.s32.totalorder %s38, 1
  %s40 = scalar_select %p39, %s38, 1
  %s41 = smul.addr %s40, 8
  %s42 = scalar_lea.vmem %s0, %s41
  %s43 = sadd.s32 0, 0
  %p44 = scmp.lt.s32.totalorder %s43, 0
  %s45 = scalar_select %p44, %s43, 0
  %s46 = smul.u32 2, %s45
  %p47 = scmp.lt.s32.totalorder %s46, 1
  %s48 = scalar_select %p47, %s46, 1
  %s49 = smul.addr %s48, 8
  %s50 = scalar_lea.vmem %s1, %s49
  %s51 = sadd.s32 0, 0
  %p52 = scmp.lt.s32.totalorder %s51, 0
  %s53 = scalar_select %p52, %s51, 0
  %s54 = smul.u32 2, %s53
  %p55 = scmp.lt.s32.totalorder %s54, 1
  %s56 = scalar_select %p55, %s54, 1
  %s57 = smul.addr %s56, 8
  %s58 = scalar_lea.vmem %s0, %s57
  %s59 = sadd.s32 0, 0
  %p60 = scmp.lt.s32.totalorder %s59, 0
  %s61 = scalar_select %p60, %s59, 0
  %s62 = smul.u32 2, %s61
  %s63 = sadd.s32 0, 0
  %p64 = scmp.lt.s32.totalorder %s63, 0
  %s65 = scalar_select %p64, %s63, 0
  %s66 = smul.u32 2, %s65
  %p67 = scmp.lt.s32.totalorder %s66, 1
  %s68 = scalar_select %p67, %s66, 1
  %s69 = smul.addr %s68, 8
  %s70 = scalar_lea.vmem %s1, %s69
  %s71 = sadd.s32 0, 0
  %p72 = scmp.lt.s32.totalorder %s71, 0
  %s73 = scalar_select %p72, %s71, 0
  %s74 = smul.u32 2, %s73
  %p75 = scmp.eq.s32.totalorder 0, 0
  // Predicated region
  $region10: #{hdr_loss.1} parent=0 // pred_check
    %p76 = pneg %p75
  $region11: #{hdr_loss.1} parent=0 // pred_check_branch
    %78 = sbr.rel (%p76) target = $region13
  $region12: #{hdr_loss.1} parent=0 // pred_region
    %79 = vst [vmem:[%s2] sm:$0xff] 0.0
  $region13: #{hdr_loss.1} parent=0 // pred_fallthru
    _
  %v80 = vld [vmem:[%s58] sm:$0xff]
  %v81 = vld [vmem:[%s58 + $0x8] sm:$0xff]
  %v82 = vld [vmem:[%s70] sm:$0xff]
  %v83 = vld [vmem:[%s70 + $0x8] sm:$0xff]
  %v84 = vsub.f32 %v80, %v82
  %v85 = vsub.f32 %v81, %v83
  %v86 = vmul.f32 %v84, %v84
  %v87 = vmul.f32 %v85, %v85
  %v88 = vld [vmem:[%s2] sm:$0xff]
  %v89 = vadd.f32 %v86, 0.0
  %v90 = vadd.f32 %v87, 0.0
  %v91 = vadd.f32 %v89, %v90
  %v92 = vadd.f32 %v88, %v91
  %93 = vst [vmem:[%s2] sm:$0xff] %v92
  // Predicated region
  $region14: #{hdr_loss.1} parent=0 // pred_check
    _
  $region15: #{hdr_loss.1} parent=0 // pred_check_branch
    %95 = sbr.rel (0) target = $region17
  $region16: #{hdr_loss.1} parent=0 // pred_region
    _
  $region17: #{hdr_loss.1} parent=0 // pred_fallthru
    _
  // Predicated region
  $region18: #{hdr_loss.1} parent=0 // pred_check
    _
  $region19: #{hdr_loss.1} parent=0 // pred_check_branch
    %97 = sbr.rel (0) target = $region21
  $region20: #{hdr_loss.1} parent=0 // pred_region
    _
  $region21: #{hdr_loss.1} parent=0 // pred_fallthru
    _

</llo_original>
